<compile_context>
chip_gen: v6e
topology: v6e:2x2x1
jax: 0.10.0
libtpu: 0.0.40
codegen_flags: <defaults>
</compile_context>

<pallas_src>
import functools

import jax
import jax.numpy as jnp
from jax import lax
from jax.experimental import pallas as pl
from jax.experimental.pallas import tpu as pltpu


def _round_up(x, m):
    return (x + m - 1) // m * m


def _ce_label_smooth_kernel(t_ref, x_ref, out_ref, *,
                            num_classes, epsilon, batch, block_rows):
    pid = pl.program_id(0)

    x = x_ref[...].astype(jnp.float32)                        # (tB, C)
    t = t_ref[...]                                            # (tB, 1) int32

    # ---- stable logsumexp along the class (lane) axis ----
    m = jnp.max(x, axis=1, keepdims=True)                     # (tB, 1)
    shifted = x - m                                           # (tB, C)
    lse = jnp.log(jnp.sum(jnp.exp(shifted), axis=1, keepdims=True))   # (tB, 1)

    # ---- smoothed weights built in-kernel (no one-hot materialized on host) ----
    uniform = jnp.float32(epsilon / num_classes)
    col = lax.broadcasted_iota(jnp.int32, shifted.shape, 1)
    w = jnp.where(col == t, jnp.float32(1.0 - epsilon) + uniform, uniform)

    # per_row = -sum(w * log_probs) = lse - sum(w * shifted)   (since sum(w) == 1)
    wdot = jnp.sum(w * shifted, axis=1, keepdims=True)        # (tB, 1)
    per_row = lse - wdot                                      # (tB, 1)

    # Mask rows of the (possibly out-of-bounds) final block; jnp.where also
    # discards any NaN/Inf produced from garbage OOB data.
    row = lax.broadcasted_iota(jnp.int32, per_row.shape, 0) + pid * block_rows
    per_row = jnp.where(row < batch, per_row, 0.0)

    partial = jnp.sum(per_row)                                # scalar f32

    # Write this step's partial sum into its own (8, 128) output tile:
    # element [0, 0] carries the value, the rest is zero.
    r8 = lax.broadcasted_iota(jnp.int32, (8, 128), 0)
    c8 = lax.broadcasted_iota(jnp.int32, (8, 128), 1)
    out_ref[...] = jnp.where((r8 == 0) & (c8 == 0), partial, jnp.float32(0.0))


def cross_entropy_label_smooth(inputs, targets, *, num_classes, epsilon=0.1,
                               block_rows=None):
    """Pallas implementation of CrossEntropyLabelSmooth.forward.

    Args:
      inputs:  (batch, num_classes) logits (float32 or bfloat16).
      targets: (batch,) integer class labels.
      num_classes: static number of classes.
      epsilon: label-smoothing weight.
      block_rows: optional row-tile override (auto-sized from a VMEM budget if None).
    Returns:
      float32 scalar loss.
    """
    inputs = jnp.asarray(inputs)
    targets = jnp.asarray(targets, jnp.int32)
    B, C = inputs.shape
    assert C == num_classes, "inputs last dim must equal num_classes"

    itemsize = jnp.dtype(inputs.dtype).itemsize
    # Sublane packing: 8 rows for f32, 16 for bf16, 32 for 8-bit dtypes.
    pack = max(8, 32 // itemsize)

    if block_rows is None:
        # ~2 MiB of f32 working tile per step; clamp to keep temporaries and the
        # double-buffered input stream well inside v7x's 64 MiB VMEM.
        budget_f32 = 2 * 1024 * 1024
        rows = budget_f32 // max(1, C * 4)
        rows = max(pack, min(rows, 1024))
    else:
        rows = max(pack, int(block_rows))
    rows = _round_up(rows, pack)
    tB = min(rows, _round_up(B, pack))

    nblk = pl.cdiv(B, tB)                    # last block may overhang; masked in-kernel
    targets2d = targets.reshape(B, 1)

    kernel = functools.partial(
        _ce_label_smooth_kernel,
        num_classes=int(num_classes), epsilon=float(epsilon),
        batch=int(B), block_rows=int(tB))

    cost = pl.CostEstimate(
        flops=7 * B * C,                       # sub, cmp, sel, mul + 3 lane reductions
        transcendentals=B * C + B,             # exp per element + log per row
        bytes_accessed=B * C * itemsize + B * 4 + nblk * 8 * 128 * 4,
    )

    partials = pl.pallas_call(
        kernel,
        out_shape=jax.ShapeDtypeStruct((nblk * 8, 128), jnp.float32),
        grid_spec=pltpu.PrefetchScalarGridSpec(
            num_scalar_prefetch=0,
            grid=(nblk,),
            in_specs=[
                pl.BlockSpec((tB, 1), lambda i: (i, 0)),   # targets (tB, 1) int32
                pl.BlockSpec((tB, C), lambda i: (i, 0)),   # logits  (tB, C)
            ],
            out_specs=pl.BlockSpec((8, 128), lambda i: (i, 0)),
        ),
        compiler_params=pltpu.CompilerParams(
            dimension_semantics=("parallel",),             # megacore sharding on v7x
            vmem_limit_bytes=32 * 1024 * 1024),
        cost_estimate=cost,
    )(targets2d, inputs)

    # Tiny final reduction + batch mean in plain JAX.
    return jnp.sum(partials) * jnp.float32(1.0 / B)


def _reference(inputs, targets, num_classes, epsilon):
    """Pure-JAX reference mirroring the PyTorch forward."""
    log_probs = jax.nn.log_softmax(jnp.asarray(inputs, jnp.float32), axis=1)
    onehot = jax.nn.one_hot(targets, num_classes, dtype=jnp.float32)
    smooth = (1.0 - epsilon) * onehot + epsilon / num_classes
    return (-smooth * log_probs).mean(0).sum()


if __name__ == "__main__":
    key = jax.random.PRNGKey(0)
    k1, k2 = jax.random.split(key)

    batch, num_classes = 20, 16          # batch not a multiple of the tile -> exercises masking
    logits = jax.random.normal(k1, (batch, num_classes), dtype=jnp.float32)
    targets = jax.random.randint(k2, (batch,), 0, num_classes, dtype=jnp.int32)

    # Forced small tile -> 3 parallel grid steps, overhanging final block, mask path.
    loss_small = cross_entropy_label_smooth(
        logits, targets, num_classes=num_classes, epsilon=0.1, block_rows=8)
    # Auto-sized tile (single step at this shape).
    loss_auto = cross_entropy_label_smooth(
        logits, targets, num_classes=num_classes, epsilon=0.1)
    jax.block_until_ready((loss_small, loss_auto))

    ref = _reference(logits, targets, num_classes, 0.1)
    assert jnp.allclose(loss_small, ref, atol=1e-5, rtol=1e-5), (loss_small, ref)
    assert jnp.allclose(loss_auto, ref, atol=1e-5, rtol=1e-5), (loss_auto, ref)

    print("KERNEL_OK")
</pallas_src>

<mosaic_0001>
module attributes {stable_mosaic.version = 11 : i64} {
  func.func @_ce_label_smooth_kernel(%arg0: i32, %arg1: memref<8x1xi32, #tpu.memory_space<vmem>>, %arg2: memref<8x16xf32, #tpu.memory_space<vmem>>, %arg3: memref<8x128xf32, #tpu.memory_space<vmem>>) attributes {dimension_semantics = [#tpu.dimension_semantics<parallel>], iteration_bounds = array<i64: 3>, scalar_prefetch = 0 : i64, scratch_operands = 0 : i64, tpu.core_type = #tpu.core_type<tc>, window_params = [{transform_indices = @transform_0, window_bounds = array<i64: 8, 1>}, {transform_indices = @transform_1, window_bounds = array<i64: 8, 16>}, {transform_indices = @transform_2, window_bounds = array<i64: 8, 128>}]} {
    %c0 = arith.constant 0 : index
    %c0_0 = arith.constant 0 : index
    %0 = vector.load %arg2[%c0, %c0_0] : memref<8x16xf32, #tpu.memory_space<vmem>>, vector<8x16xf32>
    %c0_1 = arith.constant 0 : index
    %c0_2 = arith.constant 0 : index
    %1 = vector.load %arg1[%c0_1, %c0_2] : memref<8x1xi32, #tpu.memory_space<vmem>>, vector<8x1xi32>
    %cst = arith.constant dense<0xFF800000> : vector<8xf32>
    %2 = vector.multi_reduction <maximumf>, %0, %cst [1] : vector<8x16xf32> to vector<8xf32>
    %3 = vector.shape_cast %2 : vector<8xf32> to vector<8x1xf32>
    %4 = vector.broadcast %3 : vector<8x1xf32> to vector<8x16xf32>
    %5 = arith.subf %0, %4 : vector<8x16xf32>
    %6 = math.exp %5 : vector<8x16xf32>
    %cst_3 = arith.constant dense<0.000000e+00> : vector<8xf32>
    %7 = vector.multi_reduction <add>, %6, %cst_3 [1] : vector<8x16xf32> to vector<8xf32>
    %8 = vector.shape_cast %7 : vector<8xf32> to vector<8x1xf32>
    %9 = math.log %8 : vector<8x1xf32>
    %10 = tpu.iota {dimensions = array<i32: 1>} : vector<8x16xi32>
    %11 = vector.broadcast %1 : vector<8x1xi32> to vector<8x16xi32>
    %12 = arith.cmpi eq, %10, %11 : vector<8x16xi32>
    %cst_4 = arith.constant 0.899999976 : f32
    %cst_5 = arith.constant 6.250000e-03 : f32
    %13 = arith.addf %cst_4, %cst_5 : f32
    %cst_6 = arith.constant 6.250000e-03 : f32
    %14 = vector.broadcast %13 : f32 to vector<8x16xf32>
    %15 = vector.broadcast %cst_6 : f32 to vector<8x16xf32>
    %16 = arith.select %12, %14, %15 : vector<8x16xi1>, vector<8x16xf32>
    %17 = arith.mulf %16, %5 : vector<8x16xf32>
    %cst_7 = arith.constant dense<0.000000e+00> : vector<8xf32>
    %18 = vector.multi_reduction <add>, %17, %cst_7 [1] : vector<8x16xf32> to vector<8xf32>
    %19 = vector.shape_cast %18 : vector<8xf32> to vector<8x1xf32>
    %20 = arith.subf %9, %19 : vector<8x1xf32>
    %21 = tpu.iota {dimensions = array<i32: 0>} : vector<8x1xi32>
    %c8_i32 = arith.constant 8 : i32
    %22 = arith.muli %arg0, %c8_i32 : i32
    %23 = vector.broadcast %22 : i32 to vector<8x1xi32>
    %24 = arith.addi %21, %23 : vector<8x1xi32>
    %c20_i32 = arith.constant 20 : i32
    %25 = vector.broadcast %c20_i32 : i32 to vector<8x1xi32>
    %26 = arith.cmpi slt, %24, %25 : vector<8x1xi32>
    %cst_8 = arith.constant 0.000000e+00 : f32
    %27 = vector.broadcast %cst_8 : f32 to vector<8x1xf32>
    %28 = arith.select %26, %20, %27 : vector<8x1xi1>, vector<8x1xf32>
    %29 = vector.shape_cast %28 : vector<8x1xf32> to vector<1x8x1xf32>
    %cst_9 = arith.constant dense<0.000000e+00> : vector<1xf32>
    %30 = vector.multi_reduction <add>, %29, %cst_9 [1, 2] : vector<1x8x1xf32> to vector<1xf32>
    %31 = vector.shape_cast %30 : vector<1xf32> to vector<1x1x1xf32>
    %32 = vector.extract %31[0, 0, 0] : f32 from vector<1x1x1xf32>
    %33 = tpu.iota {dimensions = array<i32: 0>} : vector<8x128xi32>
    %34 = tpu.iota {dimensions = array<i32: 1>} : vector<8x128xi32>
    %c0_i32 = arith.constant 0 : i32
    %35 = vector.broadcast %c0_i32 : i32 to vector<8x128xi32>
    %36 = arith.cmpi eq, %33, %35 : vector<8x128xi32>
    %c0_i32_10 = arith.constant 0 : i32
    %37 = vector.broadcast %c0_i32_10 : i32 to vector<8x128xi32>
    %38 = arith.cmpi eq, %34, %37 : vector<8x128xi32>
    %39 = arith.andi %36, %38 : vector<8x128xi1>
    %cst_11 = arith.constant 0.000000e+00 : f32
    %40 = vector.broadcast %32 : f32 to vector<8x128xf32>
    %41 = vector.broadcast %cst_11 : f32 to vector<8x128xf32>
    %42 = arith.select %39, %40, %41 : vector<8x128xi1>, vector<8x128xf32>
    %c0_12 = arith.constant 0 : index
    %c0_13 = arith.constant 0 : index
    %43 = vector.load %arg3[%c0_12, %c0_13] : memref<8x128xf32, #tpu.memory_space<vmem>>, vector<8x128xf32>
    tpu.vector_store %arg3[%c0_12, %c0_13], %42 {strides = array<i32>} : memref<8x128xf32, #tpu.memory_space<vmem>>, vector<8x128xf32>,
    return
  }
  func.func @transform_0(%arg0: i32) -> (i32, i32) {
    %c0_i32 = arith.constant 0 : i32
    %c0_i32_0 = arith.constant 0 : i32
    return %arg0, %c0_i32 : i32, i32
  }
  func.func @transform_1(%arg0: i32) -> (i32, i32) {
    %c0_i32 = arith.constant 0 : i32
    %c0_i32_0 = arith.constant 0 : i32
    return %arg0, %c0_i32 : i32, i32
  }
  func.func @transform_2(%arg0: i32) -> (i32, i32) {
    %c0_i32 = arith.constant 0 : i32
    %c0_i32_0 = arith.constant 0 : i32
    return %arg0, %c0_i32 : i32, i32
  }
}

</mosaic_0001>

<llo_original>
// kernel: tpu_custom_call.1
$region0: #{tpu_custom_call.1}
  #allocation0 [shape = 'u32[]', space=smem, size = 0x4, offset = 0x4, fixed_abs, tag = 'smem constant byte address 0x4 - core index']
  #allocation1 [shape = 'u32[144,128]{1,0:T(1,128)}', space=vmem, size = 0x12000, scoped, tag = 'internal scratch']
  %s0 = inlined_call_operand.vmem [shape: s32[20,1], index: 0, kind: input, shape index: {}]
  %s1 = inlined_call_operand.vmem [shape: f32[20,16], index: 1, kind: input, shape index: {}]
  %s2 = inlined_call_operand.hbm [shape: f32[24,128], index: 2, kind: output, shape index: {}]
  %s3 = sld [smem:[#allocation0]]
  $region41: #{tpu_custom_call.1} parent=0
    _
  %s5 = ssub.s32 1, %s3
  %s6 = scalar_select 0, %s5, %s3
  $region1: #{tpu_custom_call.1} parent=0
    #allocation2 [shape = 'u8[8192]{0}', space=vmem, size = 0x2000, scoped, tag = 'output window, operand 0']
    #allocation3 [shape = 's32[2]{0}', space=sflag, size = 0x8, scoped, tag = 'scoped memory for tpu_custom_call.1']
    %7 = vsyncpa [#allocation3], 0
    %s8 = scalar_lea.sflag [#allocation3], 1
    %9 = vsyncpa %s8, 0
    loop: start=0, step=1, limit=5
    $region2: #{tpu_custom_call.1} parent=1 // loop_pre_header
      _
    $region3: #{tpu_custom_call.1} parent=1 // loop_header
      %s11 = sphi 0, %s15
      %p12 = scmp.ge.s32.totalorder %s11, 5
      %s21 = sphi 0, %s23
      %s24 = sphi 0, %s21
      %s25 = sphi 0, %s24
      %s41 = sphi 0, %s25
      %s47 = sphi 0, %s49
      %s50 = sphi 0, %s47
      %s51 = sphi 0, %s50
      %s67 = sphi 0, %s51
      %s73 = sphi 0, %s75
      %s76 = sphi 0, %s73
      %s77 = sphi 0, %s76
      %s93 = sphi 0, %s77
    $region4: #{tpu_custom_call.1} parent=1 // loop_header_branch
      %14 = sbr.rel (%p12) target = $region8
    $region5: #{tpu_custom_call.1} parent=1 // loop_body
      %s16 = ssub.s32 %s11, 1
      %s17 = ssub.s32 %s11, 2
      %s18 = sadd.s32 %s11, 1
      %s19 = ssub.s32 %s11, %s18
      %p20 = scmp.eq.s32.totalorder %s19, 0
      %s22 = sadd.s32 %s21, 1
      %s23 = scalar_select %p20, %s21, %s22
      %p26 = pneg %p20
      %p27 = scmp.eq.s32.totalorder %s11, 2
      %p28 = por %p26, %p27
      %p29 = scmp.ne.s32.totalorder %s21, %s24
      %p30 = scmp.eq.s32.totalorder %s11, 0
      %p31 = por %p29, %p30
      %p32 = scmp.ne.s32.totalorder %s21, %s24
      %p33 = scmp.eq.s32.totalorder %s16, 2
      %p34 = por %p32, %p33
      %p35 = scmp.ne.s32.totalorder %s24, %s25
      %p36 = scmp.eq.s32.totalorder %s16, 0
      %p37 = por %p35, %p36
      %p38 = scmp.ne.s32.totalorder %s24, %s25
      %p39 = scmp.eq.s32.totalorder %s17, 2
      %p40 = por %p38, %p39
      %p42 = scmp.ne.s32.totalorder %s25, %s41
      %p43 = scmp.eq.s32.totalorder %s17, 0
      %p44 = por %p42, %p43
      %s45 = ssub.s32 %s11, %s18
      %p46 = scmp.eq.s32.totalorder %s45, 0
      %s48 = sadd.s32 %s47, 1
      %s49 = scalar_select %p46, %s47, %s48
      %p52 = pneg %p46
      %p53 = scmp.eq.s32.totalorder %s11, 2
      %p54 = por %p52, %p53
      %p55 = scmp.ne.s32.totalorder %s47, %s50
      %p56 = scmp.eq.s32.totalorder %s11, 0
      %p57 = por %p55, %p56
      %p58 = scmp.ne.s32.totalorder %s47, %s50
      %p59 = scmp.eq.s32.totalorder %s16, 2
      %p60 = por %p58, %p59
      %p61 = scmp.ne.s32.totalorder %s50, %s51
      %p62 = scmp.eq.s32.totalorder %s16, 0
      %p63 = por %p61, %p62
      %p64 = scmp.ne.s32.totalorder %s50, %s51
      %p65 = scmp.eq.s32.totalorder %s17, 2
      %p66 = por %p64, %p65
      %p68 = scmp.ne.s32.totalorder %s51, %s67
      %p69 = scmp.eq.s32.totalorder %s17, 0
      %p70 = por %p68, %p69
      %s71 = ssub.s32 %s11, %s18
      %p72 = scmp.eq.s32.totalorder %s71, 0
      %s74 = sadd.s32 %s73, 1
      %s75 = scalar_select %p72, %s73, %s74
      %p78 = pneg %p72
      %p79 = scmp.eq.s32.totalorder %s11, 2
      %p80 = por %p78, %p79
      %p81 = scmp.ne.s32.totalorder %s73, %s76
      %p82 = scmp.eq.s32.totalorder %s11, 0
      %p83 = por %p81, %p82
      %p84 = scmp.ne.s32.totalorder %s73, %s76
      %p85 = scmp.eq.s32.totalorder %s16, 2
      %p86 = por %p84, %p85
      %p87 = scmp.ne.s32.totalorder %s76, %s77
      %p88 = scmp.eq.s32.totalorder %s16, 0
      %p89 = por %p87, %p88
      %p90 = scmp.ne.s32.totalorder %s76, %s77
      %p91 = scmp.eq.s32.totalorder %s17, 2
      %p92 = por %p90, %p91
      %p94 = scmp.ne.s32.totalorder %s77, %s93
      %p95 = scmp.eq.s32.totalorder %s17, 0
      %p96 = por %p94, %p95
      %p97 = scmp.le.s32.totalorder 1, %s11
      %p98 = scmp.lt.s32.totalorder %s11, 4
      %p99 = pnand %p97, %p98
      %p100 = pneg %p99
      // Predicated region
      $region9: #{tpu_custom_call.1} parent=5 // pred_check
        _
      $region10: #{tpu_custom_call.1} parent=5 // pred_check_branch
        %102 = sbr.rel (%p99) target = $region12
      $region11: #{tpu_custom_call.1} parent=5 // pred_region
        %s103 = ssub.s32 %s11, 1
      $region12: #{tpu_custom_call.1} parent=5 // pred_fallthru
        _
      %p104 = scmp.lt.s32.totalorder %s11, 3
      // Predicated region
      $region13: #{tpu_custom_call.1} parent=5 // pred_check
        %p105 = pneg %p104
      $region14: #{tpu_custom_call.1} parent=5 // pred_check_branch
        %107 = sbr.rel (%p105) target = $region16
      $region15: #{tpu_custom_call.1} parent=5 // pred_region
        // Predicated region
        $region17: #{tpu_custom_call.1} parent=15 // pred_check
          %p108 = pneg %p31
        $region18: #{tpu_custom_call.1} parent=15 // pred_check_branch
          %110 = sbr.rel (%p108) target = $region20
        $region19: #{tpu_custom_call.1} parent=15 // pred_region
          %p111 = scmp.lt.s32.totalorder %s11, 2
          %s112 = scalar_select %p111, %s11, 2
          %s113 = smul.addr %s112, 8
          %s114 = scalar_lea.vmem %s0, %s113
        $region20: #{tpu_custom_call.1} parent=15 // pred_fallthru
          _
        // Predicated region
        $region21: #{tpu_custom_call.1} parent=15 // pred_check
          %p115 = pneg %p57
        $region22: #{tpu_custom_call.1} parent=15 // pred_check_branch
          %117 = sbr.rel (%p115) target = $region24
        $region23: #{tpu_custom_call.1} parent=15 // pred_region
          %p118 = scmp.lt.s32.totalorder %s11, 2
          %s119 = scalar_select %p118, %s11, 2
          %s120 = smul.addr %s119, 8
          %s121 = scalar_lea.vmem %s1, %s120
        $region24: #{tpu_custom_call.1} parent=15 // pred_fallthru
          _
      $region16: #{tpu_custom_call.1} parent=5 // pred_fallthru
        _
      %p122 = scmp.le.s32.totalorder 1, %s11
      %p123 = scmp.lt.s32.totalorder %s11, 4
      %p124 = pnand %p122, %p123
      %p125 = pneg %p124
      // Predicated region
      $region25: #{tpu_custom_call.1} parent=5 // pred_check
        _
      $region26: #{tpu_custom_call.1} parent=5 // pred_check_branch
        %127 = sbr.rel (%p124) target = $region28
      $region27: #{tpu_custom_call.1} parent=5 // pred_region
        %s128 = ssub.s32 %s11, 1
        %p129 = scmp.lt.s32.totalorder %s16, 2
        %s130 = scalar_select %p129, %s16, 2
        %s131 = smul.addr %s130, 8
        %s132 = scalar_lea.vmem %s0, %s131
        %p133 = pneg %p37
        %p134 = pneg %p34
        %p135 = scmp.lt.s32.totalorder %s16, 2
        %s136 = scalar_select %p135, %s16, 2
        %s137 = smul.addr %s136, 8
        %s138 = scalar_lea.vmem %s1, %s137
        %p139 = pneg %p63
        %p140 = pneg %p60
        %p141 = pneg %p89
        %p142 = pneg %p86
        %s143 = sand.u32 %s76, 1
        %s144 = scalar_lea.sflag [#allocation3], %s143
        %s145 = sand.u32 %s76, 1
        %s146 = smul.addr %s145, 8
        %s147 = scalar_lea.vmem [#allocation2], %s146
        %p148 = scmp.lt.s32.totalorder %s16, 2
        %s149 = scalar_select %p148, %s16, 2
        %s150 = smul.addr %s149, 8
        %s151 = scalar_lea.vmem %s0, %s150
        %p152 = scmp.lt.s32.totalorder %s16, 2
        %s153 = scalar_select %p152, %s16, 2
        %s154 = smul.addr %s153, 8
        %s155 = scalar_lea.vmem %s1, %s154
        %v156 = vld [vmem:[%s155] sm:$0xff]
        %v157 = vld [vmem:[%s151] sm:$0xff]
        %vm158 = vcmask 130048
        %v159 = vsel %vm158, %v156, -inf
        %160 = vmax.xlane.f32.xlu0 %v159
        %v161 = vpop.xlane.xlu0 %160
        %v162 = vsub.f32 %v156, %v161
        %v163 = vmul.f32 %v162, 1.442695
        %v164 = vpow.pop %v163
        %v165 = vsel %vm158, %v164, 0.0
        %166 = vadd.xlane.f32.xlu0 %v165
        %v167 = vpop.xlane.xlu0 %166
        %v168 = vlog2.pop %v167
        %v169 = vmul.f32 %v168, 0.6931472
        %v170 = vlaneseq
        %v171 = vand.u32 %v170, 127
        %172 = vset.pattern.permute.xlu0 0
        %173 = vperm.xlu0 %172, %v157
        %v174 = vpop.permute.xlu0 %173
        %vm175 = vcmp.eq.s32.totalorder %v171, %v174
        %v176 = vsel %vm175, 0.90625, 0.00625
        %v177 = vmul.f32 %v176, %v162
        %v178 = vsel %vm158, %v177, 0.0
        %179 = vadd.xlane.f32.xlu0 %v178
        %v180 = vpop.xlane.xlu0 %179
        %v181 = vsub.f32 %v169, %v180
        %v182 = vlaneseq
        %v183 = vshrl.u32 %v182, 7
        %s184 = smul.u32 %s16, 8
        %v185 = vstv %s184
        %v186 = vadd.s32 %v183, %v185
        %vm187 = vcmp.lt.s32.totalorder %v186, 20
        %v188 = vsel %vm187, %v181, 0.0
        %vm189 = vcmask 7168
        %v190 = vsel %vm189, %v188, 0.0
        %191 = vadd.xlane.f32.xlu0 %v190
        %v192 = vpop.xlane.xlu0 %191
        %v193 = vrot.slane %v192, 4
        %v194 = vadd.f32 %v192, %v193
        %v195 = vrot.slane %v194, 2
        %v196 = vadd.f32 %v194, %v195
        %v197 = vrot.slane %v196, 1
        %v198 = vadd.f32 %v196, %v197
        %s199 = vtos %v198
        %vm200 = vcmp.eq.s32.totalorder %v183, 0
        %vm201 = vcmp.eq.s32.totalorder %v171, 0
        %vm202 = vmand %vm200, %vm201
        %v203 = vstv %s199
        %v204 = vsel %vm202, %v203, 0.0
        %205 = vst [vmem:[%s147] sm:$0xff] %v204
        %s206 = sand.u32 %s76, 1
        %s207 = scalar_lea.sflag [#allocation3], %s206
        %s208 = sand.u32 %s76, 1
        %s209 = smul.addr %s208, 8
        %s210 = scalar_lea.vmem [#allocation2], %s209
        // Predicated region
        $region29: #{tpu_custom_call.1} parent=27 // pred_check
          %p211 = pneg %p86
        $region30: #{tpu_custom_call.1} parent=27 // pred_check_branch
          %213 = sbr.rel (%p211) target = $region32
        $region31: #{tpu_custom_call.1} parent=27 // pred_region
          %s215 = ssub.s32 128, 128
          %216 = vsyncadd %s207, %s215
          %s217 = smul.addr %s16, 128
          %s218 = scalar_lea.hbm %s2, %s217
          %s220 = sshll.u32 %s210, 4
          %s221 = int_to_ptr.vmem [resolvable:$true] %s220
          %223 = dma.vmem_to_hbm [thread:$0]  %s221, 128, %s218, %s207
        $region32: #{tpu_custom_call.1} parent=27 // pred_fallthru
          _
      $region28: #{tpu_custom_call.1} parent=5 // pred_fallthru
        _
      %p224 = scmp.le.s32.totalorder 2, %s11
      // Predicated region
      $region33: #{tpu_custom_call.1} parent=5 // pred_check
        %p225 = pneg %p224
      $region34: #{tpu_custom_call.1} parent=5 // pred_check_branch
        %227 = sbr.rel (%p225) target = $region36
      $region35: #{tpu_custom_call.1} parent=5 // pred_region
        %s228 = ssub.s32 %s11, 2
        // Predicated region
        $region37: #{tpu_custom_call.1} parent=35 // pred_check
          %p229 = pneg %p92
        $region38: #{tpu_custom_call.1} parent=35 // pred_check_branch
          %231 = sbr.rel (%p229) target = $region40
        $region39: #{tpu_custom_call.1} parent=35 // pred_region
          %s232 = sand.u32 %s77, 1
          %s233 = scalar_lea.sflag [#allocation3], %s232
          %s234 = sand.u32 %s77, 1
          %s235 = smul.addr %s234, 8
          %s236 = scalar_lea.vmem [#allocation2], %s235
          %237 = dma.done %s233, 128
        $region40: #{tpu_custom_call.1} parent=35 // pred_fallthru
          _
      $region36: #{tpu_custom_call.1} parent=5 // pred_fallthru
        _
    $region6: #{tpu_custom_call.1} parent=1 // loop_footer
      %s15 = sadd.s32 1, %s11
    $region7: #{tpu_custom_call.1} parent=1 // loop_footer_branch
      %10 = sbr.rel target = $region3
    $region8: #{tpu_custom_call.1} parent=1 // loop_exit
      _
    %238 = vsyncpa [#allocation3], 1
    %s239 = scalar_lea.sflag [#allocation3], 1
    %240 = vsyncpa %s239, 1

</llo_original>
